<compile_context>
chip_gen: v6e
topology: v6e:2x2x1
jax: 0.10.0
libtpu: 0.0.40
codegen_flags: <defaults>
</compile_context>

<pallas_src>
import functools

import jax
import jax.numpy as jnp
from jax.experimental import pallas as pl
from jax.experimental.pallas import tpu as pltpu


def _round_up(a, m):
    return ((a + m - 1) // m) * m


def _choose_fold(dims, mxu_tile=256, max_fold=16):
    """Largest power-of-2 fold such that fold * max(dims) <= mxu_tile.

    Keeps the block-diagonal matmuls within one MXU tile on v6e/v7x so batch
    folding adds lane density without adding MXU passes."""
    fold = 1
    while fold < max_fold and 2 * fold * max(dims) <= mxu_tile:
        fold *= 2
    return fold


def _make_mlp_kernel(num_layers, out_dims, hidden_activation, output_activation,
                     act_dtype):
    """Fused MLP kernel: (x_ref, w0..w_{L-1}, b_all_ref, o_ref)."""
    offsets = []
    off = 0
    for d in out_dims:
        offsets.append(off)
        off += d

    def kernel(x_ref, *rest):
        w_refs = rest[:num_layers]
        b_all_ref = rest[num_layers]
        o_ref = rest[num_layers + 1]

        h = x_ref[...]
        for layer in range(num_layers):
            w = w_refs[layer][...]
            b = b_all_ref[:, offsets[layer]:offsets[layer] + out_dims[layer]]
            # f32 accumulation on the MXU regardless of operand dtype.
            acc = jnp.dot(h, w, preferred_element_type=jnp.float32) + b
            if layer < num_layers - 1:
                # Stream the next matmul's LHS in the compute dtype (native
                # bf16 MXU path when compute_dtype=bf16; no-op for f32).
                h = hidden_activation(acc).astype(act_dtype)
            else:
                h = acc
        if output_activation is not None:
            h = output_activation(h)
        o_ref[...] = h.astype(o_ref.dtype)

    return kernel


def approx_function_forward(
    x,
    weights,   # list of (in_features, out_features) arrays (transposed vs torch)
    biases,    # list of (out_features,) arrays
    hidden_activation=lambda v: jnp.maximum(v, 0.0),  # F.relu
    output_activation=None,
    block_rows=8192,      # large batch tile; per-row payload is tiny
    compute_dtype=None,   # e.g. jnp.bfloat16 to halve streamed HBM bytes
):
    """Fused MLP forward matching ApproxFunction.forward semantics."""
    num_layers = len(weights)
    assert len(biases) == num_layers

    batch, in_features = x.shape
    out_dims_orig = [w.shape[1] for w in weights]
    out_features = out_dims_orig[-1]
    out_dtype = x.dtype
    cdt = compute_dtype if compute_dtype is not None else x.dtype

    # ---- batch folding with block-diagonal weights (lane densification) ----
    dims = [in_features] + list(out_dims_orig)
    fold = _choose_fold(dims)
    eye = jnp.eye(fold, dtype=cdt)
    w_folded = [jnp.kron(eye, w.astype(cdt)) for w in weights]   # (fold*in, fold*out)
    b_all = jnp.concatenate(
        [jnp.tile(b.astype(jnp.float32), fold) for b in biases]).reshape(1, -1)
    folded_out_dims = [fold * d for d in out_dims_orig]
    in_folded = fold * in_features
    out_folded = fold * out_features

    # ---- batch tiling -------------------------------------------------------
    # tb in *original* rows; folded tile rows must be a multiple of 16 for
    # sublane packing (covers both f32 and bf16).
    row_mult = fold * 16
    tb = max(row_mult, _round_up(min(block_rows, batch), row_mult))
    if batch >= 2 * row_mult:
        # Keep >= 2 grid steps so "parallel" semantics can feed both
        # TensorCores on v7x.
        tb = min(tb, _round_up(pl.cdiv(batch, 2), row_mult))
    padded_batch = _round_up(batch, tb)

    x_in = x.astype(cdt)
    if padded_batch != batch:
        x_in = jnp.pad(x_in, ((0, padded_batch - batch), (0, 0)))
    x_in = x_in.reshape(padded_batch // fold, in_folded)   # contiguous, free

    tbf = tb // fold
    grid = (padded_batch // tb,)

    # x / out stream over the batch grid axis; weights + packed biases use a
    # constant index_map so they stay VMEM-resident across grid steps.
    in_specs = [pl.BlockSpec((tbf, in_folded), lambda i: (i, 0))]
    operands = [x_in]
    for w in w_folded:
        in_specs.append(pl.BlockSpec(w.shape, lambda i: (0, 0)))
        operands.append(w)
    in_specs.append(pl.BlockSpec(b_all.shape, lambda i: (0, 0)))
    operands.append(b_all)
    out_spec = pl.BlockSpec((tbf, out_folded), lambda i: (i, 0))

    kernel = _make_mlp_kernel(
        num_layers, folded_out_dims, hidden_activation, output_activation, cdt)

    # ---- explicit VMEM budget (lane-padded, double-buffered) ----------------
    lane = 128
    act_isz = jnp.dtype(cdt).itemsize
    out_isz = jnp.dtype(out_dtype).itemsize
    max_feat = max([in_folded] + folded_out_dims)
    est = 2 * tbf * _round_up(in_folded, lane) * act_isz
    est += 2 * tbf * _round_up(out_folded, lane) * out_isz
    est += 2 * sum(_round_up(w.shape[0], 8) * _round_up(w.shape[1], lane) * act_isz
                   for w in w_folded)
    est += 2 * 8 * _round_up(b_all.shape[1], lane) * 4
    est += 4 * tbf * _round_up(max_feat, lane) * 4      # live f32 intermediates
    # Floor above the v5e 16 MiB default scoped limit; ceiling well under
    # v7x's 64 MiB physical VMEM.
    vmem_limit = int(min(max(2 * est, 32 << 20), 48 << 20))

    out = pl.pallas_call(
        kernel,
        out_shape=jax.ShapeDtypeStruct((padded_batch // fold, out_folded), out_dtype),
        grid=grid,
        in_specs=in_specs,
        out_specs=out_spec,
        compiler_params=pltpu.CompilerParams(
            dimension_semantics=("parallel",),   # shard row-tiles across TCs
            vmem_limit_bytes=vmem_limit,
        ),
    )(*operands)

    out = out.reshape(padded_batch, out_features)   # contiguous, free
    if padded_batch != batch:
        out = out[:batch]
    return out


def init_params(key, input_size, output_size, hidden_dims, dtype=jnp.float32):
    """Deterministic init mirroring nn.Linear default (uniform +-1/sqrt(fan_in)).

    Weights are created directly in (in_features, out_features) layout.
    """
    dims = [input_size] + list(hidden_dims) + [output_size]
    weights, biases = [], []
    for i in range(len(dims) - 1):
        fan_in, fan_out = dims[i], dims[i + 1]
        key, wk, bk = jax.random.split(key, 3)
        bound = 1.0 / (fan_in ** 0.5)
        w = jax.random.uniform(wk, (fan_in, fan_out), dtype, -bound, bound)
        b = jax.random.uniform(bk, (fan_out,), dtype, -bound, bound)
        weights.append(w)
        biases.append(b)
    return weights, biases


def reference_forward(x, weights, biases, output_activation=None):
    """Pure-JAX reference matching the PyTorch forward exactly."""
    h = x
    for i, (w, b) in enumerate(zip(weights, biases)):
        h = h @ w + b
        if i < len(weights) - 1:
            h = jnp.maximum(h, 0.0)  # F.relu hidden activation
    if output_activation is not None:
        h = output_activation(h)
    return h


if __name__ == "__main__":
    # Shapes consistent with the module:
    #   ApproxFunction(input_size=32, output_size=8, hidden_dims=[64, 32])
    input_size = 32
    output_size = 8
    hidden_dims = [64, 32]

    key = jax.random.PRNGKey(0)
    weights, biases = init_params(key, input_size, output_size, hidden_dims)

    fwd = jax.jit(
        functools.partial(
            approx_function_forward,
            output_activation=None,
            block_rows=4096,
        )
    )

    # 1) Small batch (single grid step, padded to the fold/sublane multiple).
    key, xk = jax.random.split(key)
    x_small = jax.random.normal(xk, (8, input_size), jnp.float32)
    out_small = jax.block_until_ready(fwd(x_small, weights, biases))
    ref_small = reference_forward(x_small, weights, biases)
    assert out_small.shape == (8, output_size)
    assert jnp.allclose(out_small, ref_small, atol=1e-5, rtol=1e-5), (
        f"max abs err {jnp.max(jnp.abs(out_small - ref_small))}"
    )

    # 2) Larger non-multiple batch: exercises the >=2-step batch grid, param
    #    residency, batch folding, and remainder padding/slicing.
    key, xk = jax.random.split(key)
    x_big = jax.random.normal(xk, (1000, input_size), jnp.float32)
    out_big = jax.block_until_ready(fwd(x_big, weights, biases))
    ref_big = reference_forward(x_big, weights, biases)
    assert out_big.shape == (1000, output_size)
    assert jnp.allclose(out_big, ref_big, atol=1e-5, rtol=1e-5), (
        f"max abs err {jnp.max(jnp.abs(out_big - ref_big))}"
    )

    # 3) bf16 streaming mode (perf option): same semantics up to bf16 rounding.
    fwd_bf16 = jax.jit(
        functools.partial(
            approx_function_forward,
            output_activation=None,
            block_rows=4096,
            compute_dtype=jnp.bfloat16,
        )
    )
    out_bf16 = jax.block_until_ready(fwd_bf16(x_big, weights, biases))
    assert out_bf16.shape == (1000, output_size)
    assert out_bf16.dtype == x_big.dtype
    assert jnp.allclose(out_bf16, ref_big, atol=5e-2, rtol=5e-2), (
        f"max abs err {jnp.max(jnp.abs(out_bf16 - ref_big))}"
    )

    print("KERNEL_OK")
</pallas_src>

<mosaic_0001>
module attributes {stable_mosaic.version = 11 : i64} {
  func.func @kernel(%arg0: i32, %arg1: memref<16x128xf32, #tpu.memory_space<vmem>>, %arg2: memref<128x256xf32, #tpu.memory_space<vmem>>, %arg3: memref<256x128xf32, #tpu.memory_space<vmem>>, %arg4: memref<128x32xf32, #tpu.memory_space<vmem>>, %arg5: memref<1x416xf32, #tpu.memory_space<vmem>>, %arg6: memref<16x32xf32, #tpu.memory_space<vmem>>) attributes {dimension_semantics = [#tpu.dimension_semantics<parallel>], iteration_bounds = array<i64: 1>, scalar_prefetch = 0 : i64, scratch_operands = 0 : i64, tpu.core_type = #tpu.core_type<tc>, window_params = [{transform_indices = @transform_0, window_bounds = array<i64: 16, 128>}, {pipeline_mode = #tpu.pipeline_mode<synchronous>, transform_indices = @transform_1, window_bounds = array<i64: 128, 256>}, {pipeline_mode = #tpu.pipeline_mode<synchronous>, transform_indices = @transform_2, window_bounds = array<i64: 256, 128>}, {pipeline_mode = #tpu.pipeline_mode<synchronous>, transform_indices = @transform_3, window_bounds = array<i64: 128, 32>}, {pipeline_mode = #tpu.pipeline_mode<synchronous>, transform_indices = @transform_4, window_bounds = array<i64: 1, 416>}, {transform_indices = @transform_5, window_bounds = array<i64: 16, 32>}]} {
    %c0 = arith.constant 0 : index
    %c0_0 = arith.constant 0 : index
    %0 = vector.load %arg1[%c0, %c0_0] : memref<16x128xf32, #tpu.memory_space<vmem>>, vector<16x128xf32>
    %c0_1 = arith.constant 0 : index
    %c0_2 = arith.constant 0 : index
    %1 = vector.load %arg2[%c0_1, %c0_2] : memref<128x256xf32, #tpu.memory_space<vmem>>, vector<128x256xf32>
    %c0_3 = arith.constant 0 : index
    %c0_4 = arith.constant 0 : index
    %2 = vector.load %arg5[%c0_3, %c0_4] : memref<1x416xf32, #tpu.memory_space<vmem>>, vector<1x256xf32>
    %cst = arith.constant dense<0.000000e+00> : vector<16x256xf32>
    %3 = tpu.matmul %0, %1, %cst {dimension_numbers = #tpu.dot_dimension_numbers<[1], [0], [0], [1], [0, 0, 1, 1], [], []>} : vector<16x128xf32>, vector<128x256xf32>, vector<16x256xf32> -> vector<16x256xf32>
    %4 = vector.broadcast %2 : vector<1x256xf32> to vector<16x256xf32>
    %5 = arith.addf %3, %4 : vector<16x256xf32>
    %cst_5 = arith.constant 0.000000e+00 : f32
    %6 = vector.broadcast %cst_5 : f32 to vector<16x256xf32>
    %7 = arith.maximumf %5, %6 : vector<16x256xf32>
    %c0_6 = arith.constant 0 : index
    %c0_7 = arith.constant 0 : index
    %8 = vector.load %arg3[%c0_6, %c0_7] : memref<256x128xf32, #tpu.memory_space<vmem>>, vector<256x128xf32>
    %c0_8 = arith.constant 0 : index
    %c256 = arith.constant 256 : index
    %9 = vector.load %arg5[%c0_8, %c256] : memref<1x416xf32, #tpu.memory_space<vmem>>, vector<1x128xf32>
    %cst_9 = arith.constant dense<0.000000e+00> : vector<16x128xf32>
    %10 = tpu.matmul %7, %8, %cst_9 {dimension_numbers = #tpu.dot_dimension_numbers<[1], [0], [0], [1], [0, 0, 1, 1], [], []>} : vector<16x256xf32>, vector<256x128xf32>, vector<16x128xf32> -> vector<16x128xf32>
    %11 = vector.broadcast %9 : vector<1x128xf32> to vector<16x128xf32>
    %12 = arith.addf %10, %11 : vector<16x128xf32>
    %cst_10 = arith.constant 0.000000e+00 : f32
    %13 = vector.broadcast %cst_10 : f32 to vector<16x128xf32>
    %14 = arith.maximumf %12, %13 : vector<16x128xf32>
    %c0_11 = arith.constant 0 : index
    %c0_12 = arith.constant 0 : index
    %15 = vector.load %arg4[%c0_11, %c0_12] : memref<128x32xf32, #tpu.memory_space<vmem>>, vector<128x32xf32>
    %c0_13 = arith.constant 0 : index
    %c384 = arith.constant 384 : index
    %16 = vector.load %arg5[%c0_13, %c384] : memref<1x416xf32, #tpu.memory_space<vmem>>, vector<1x32xf32>
    %cst_14 = arith.constant dense<0.000000e+00> : vector<16x32xf32>
    %17 = tpu.matmul %14, %15, %cst_14 {dimension_numbers = #tpu.dot_dimension_numbers<[1], [0], [0], [1], [0, 0, 1, 1], [], []>} : vector<16x128xf32>, vector<128x32xf32>, vector<16x32xf32> -> vector<16x32xf32>
    %18 = vector.broadcast %16 : vector<1x32xf32> to vector<16x32xf32>
    %19 = arith.addf %17, %18 : vector<16x32xf32>
    %c0_15 = arith.constant 0 : index
    %c0_16 = arith.constant 0 : index
    %20 = vector.load %arg6[%c0_15, %c0_16] : memref<16x32xf32, #tpu.memory_space<vmem>>, vector<16x32xf32>
    tpu.vector_store %arg6[%c0_15, %c0_16], %19 {strides = array<i32>} : memref<16x32xf32, #tpu.memory_space<vmem>>, vector<16x32xf32>,
    return
  }
  func.func @transform_0(%arg0: i32) -> (i32, i32) {
    %c0_i32 = arith.constant 0 : i32
    %c0_i32_0 = arith.constant 0 : i32
    return %arg0, %c0_i32 : i32, i32
  }
  func.func @transform_1(%arg0: i32) -> (i32, i32) {
    %c0_i32 = arith.constant 0 : i32
    %c0_i32_0 = arith.constant 0 : i32
    %c0_i32_1 = arith.constant 0 : i32
    return %c0_i32, %c0_i32_0 : i32, i32
  }
  func.func @transform_2(%arg0: i32) -> (i32, i32) {
    %c0_i32 = arith.constant 0 : i32
    %c0_i32_0 = arith.constant 0 : i32
    %c0_i32_1 = arith.constant 0 : i32
    return %c0_i32, %c0_i32_0 : i32, i32
  }
  func.func @transform_3(%arg0: i32) -> (i32, i32) {
    %c0_i32 = arith.constant 0 : i32
    %c0_i32_0 = arith.constant 0 : i32
    %c0_i32_1 = arith.constant 0 : i32
    return %c0_i32, %c0_i32_0 : i32, i32
  }
  func.func @transform_4(%arg0: i32) -> (i32, i32) {
    %c0_i32 = arith.constant 0 : i32
    %c0_i32_0 = arith.constant 0 : i32
    %c0_i32_1 = arith.constant 0 : i32
    return %c0_i32, %c0_i32_0 : i32, i32
  }
  func.func @transform_5(%arg0: i32) -> (i32, i32) {
    %c0_i32 = arith.constant 0 : i32
    %c0_i32_0 = arith.constant 0 : i32
    return %arg0, %c0_i32 : i32, i32
  }
}

</mosaic_0001>

<llo_original>
// kernel: tile.18
$region0: #{tile.18}
  #allocation0 [shape = 's32[1]{0}', space=sflag, size = 0x4, scoped, tag = 'scoped memory for tile.18']
  %s0 = inlined_call_operand.vmem [shape: f32[64], index: 0, kind: input, shape index: {}]
  %s1 = inlined_call_operand.vmem [shape: f32[4,64], index: 1, kind: output, shape index: {}]
  // Predicated region
  $region2: #{tile.18} parent=0 // pred_check
    _
  $region3: #{tile.18} parent=0 // pred_check_branch
    %3 = sbr.rel (0) target = $region5
  $region4: #{tile.18} parent=0 // pred_region
    _
  $region5: #{tile.18} parent=0 // pred_fallthru
    _
  %v4 = vld [vmem:[%s0] ss:$0 sm:$0xff]
  %5 = vst [vmem:[%s1] sm:$0xf] %v4

// kernel: tile.19
$region0: #{tile.19}
  %s0 = inlined_call_operand.vmem [shape: f32[4,64], index: 0, kind: input, shape index: {}]
  %s1 = inlined_call_operand.vmem [shape: f32[256], index: 1, kind: output, shape index: {}]
  $region1: #{tile.19} parent=0
    #allocation0 [shape = 'u8[4096]{0}', space=vmem, size = 0x1000, scoped, tag = 'scoped mem for output reshape']
    #allocation1 [shape = 'u8[4096]{0}', space=vmem, size = 0x1000, scoped, tag = 'scoped mem for input reshape']
    %s3 = sshll.u32 1, 4
    %s4 = ssub.s32 %s3, 1
    %v5 = vld [vmem:[%s0] sm:%s4]
    %6 = vst [vmem:[#allocation1] sm:%s4] %v5
    %s7 = smov 3
    %v8 = vld [vmem:[#allocation1] ss:$2 sm:%s7]
    %vm9 = vcmask 523264
    %10 = vst.msk [vmem:[#allocation0] sm:$0x3] %vm9, %v8
    %s11 = scalar_lea.vmem [#allocation1], 1
    %s12 = smov 3
    %v13 = vld [vmem:[%s11] ss:$2 sm:%s12]
    %14 = vrot.lane.b32.xlu0 %v13, 64
    %v15 = vpop.permute.xlu0 %14
    %vm16 = vcmask 1048064
    %17 = vst.msk [vmem:[#allocation0] sm:$0x3] %vm16, %v15
    %s19 = sshll.u32 1, 2
    %s20 = ssub.s32 %s19, 1
    %v22 = vld [vmem:[#allocation0] sm:%s20]
    %s23 = sshll.u32 1, 2
    %s24 = ssub.s32 %s23, 1
    %25 = vst [vmem:[%s1] sm:%s24] %v22

// kernel: tile.23
$region0: #{tile.23}
  #allocation0 [shape = 's32[1]{0}', space=sflag, size = 0x4, scoped, tag = 'scoped memory for tile.23']
  %s0 = inlined_call_operand.vmem [shape: f32[32], index: 0, kind: input, shape index: {}]
  %s1 = inlined_call_operand.vmem [shape: f32[4,32], index: 1, kind: output, shape index: {}]
  // Predicated region
  $region2: #{tile.23} parent=0 // pred_check
    _
  $region3: #{tile.23} parent=0 // pred_check_branch
    %3 = sbr.rel (0) target = $region5
  $region4: #{tile.23} parent=0 // pred_region
    _
  $region5: #{tile.23} parent=0 // pred_fallthru
    _
  %v4 = vld [vmem:[%s0] ss:$0 sm:$0xff]
  %5 = vst [vmem:[%s1] sm:$0xf] %v4

// kernel: tile.24
$region0: #{tile.24}
  %s0 = inlined_call_operand.vmem [shape: f32[4,32], index: 0, kind: input, shape index: {}]
  %s1 = inlined_call_operand.vmem [shape: f32[128], index: 1, kind: output, shape index: {}]
  $region1: #{tile.24} parent=0
    #allocation0 [shape = 'u8[4096]{0}', space=vmem, size = 0x1000, scoped, tag = 'scoped mem for output reshape']
    #allocation1 [shape = 'u8[4096]{0}', space=vmem, size = 0x1000, scoped, tag = 'scoped mem for input reshape']
    %s3 = sshll.u32 1, 4
    %s4 = ssub.s32 %s3, 1
    %v5 = vld [vmem:[%s0] sm:%s4]
    %6 = vst [vmem:[#allocation1] sm:%s4] %v5
    %v7 = vld [vmem:[#allocation1] sm:$0x1]
    %vm8 = vcmask 261120
    %9 = vst.msk [vmem:[#allocation0] sm:$0x1] %vm8, %v7
    %s10 = scalar_lea.vmem [#allocation1], 3
    %v11 = vld [vmem:[%s10] sm:$0x1]
    %12 = vrot.lane.b32.xlu0 %v11, 96
    %v13 = vpop.permute.xlu0 %12
    %vm14 = vcmask 1048320
    %15 = vst.msk [vmem:[#allocation0] sm:$0x1] %vm14, %v13
    %s16 = scalar_lea.vmem [#allocation1], 2
    %v17 = vld [vmem:[%s16] sm:$0x1]
    %18 = vrot.lane.b32.xlu0 %v17, 64
    %v19 = vpop.permute.xlu0 %18
    %vm20 = vcmask 785920
    %21 = vst.msk [vmem:[#allocation0] sm:$0x1] %vm20, %v19
    %s22 = scalar_lea.vmem [#allocation1], 1
    %v23 = vld [vmem:[%s22] sm:$0x1]
    %24 = vrot.lane.b32.xlu0 %v23, 32
    %v25 = vpop.permute.xlu0 %24
    %vm26 = vcmask 523520
    %27 = vst.msk [vmem:[#allocation0] sm:$0x1] %vm26, %v25
    %s29 = sshll.u32 1, 1
    %s30 = ssub.s32 %s29, 1
    %v32 = vld [vmem:[#allocation0] sm:%s30]
    %s33 = sshll.u32 1, 1
    %s34 = ssub.s32 %s33, 1
    %35 = vst [vmem:[%s1] sm:%s34] %v32

// kernel: tile.28
$region0: #{tile.28}
  #allocation0 [shape = 's32[1]{0}', space=sflag, size = 0x4, scoped, tag = 'scoped memory for tile.28']
  %s0 = inlined_call_operand.vmem [shape: f32[8], index: 0, kind: input, shape index: {}]
  %s1 = inlined_call_operand.vmem [shape: f32[4,8], index: 1, kind: output, shape index: {}]
  // Predicated region
  $region2: #{tile.28} parent=0 // pred_check
    _
  $region3: #{tile.28} parent=0 // pred_check_branch
    %3 = sbr.rel (0) target = $region5
  $region4: #{tile.28} parent=0 // pred_region
    _
  $region5: #{tile.28} parent=0 // pred_fallthru
    _
  %v4 = vld [vmem:[%s0] ss:$0 sm:$0xff]
  %5 = vst [vmem:[%s1] sm:$0xf] %v4

// kernel: tile.29
$region0: #{tile.29}
  %s0 = inlined_call_operand.vmem [shape: f32[4,8], index: 0, kind: input, shape index: {}]
  %s1 = inlined_call_operand.vmem [shape: f32[32], index: 1, kind: output, shape index: {}]
  $region1: #{tile.29} parent=0
    #allocation0 [shape = 'u8[4096]{0}', space=vmem, size = 0x1000, scoped, tag = 'scoped mem for output reshape']
    #allocation1 [shape = 'u8[4096]{0}', space=vmem, size = 0x1000, scoped, tag = 'scoped mem for input reshape']
    %s3 = sshll.u32 1, 4
    %s4 = ssub.s32 %s3, 1
    %v5 = vld [vmem:[%s0] sm:%s4]
    %6 = vst [vmem:[#allocation1] sm:%s4] %v5
    %v7 = vld [vmem:[#allocation1] sm:$0x1]
    %vm8 = vcmask 64512
    %9 = vst.msk [vmem:[#allocation0] sm:$0x1] %vm8, %v7
    %s10 = scalar_lea.vmem [#allocation1], 3
    %v11 = vld [vmem:[%s10] sm:$0x1]
    %12 = vrot.lane.b32.xlu0 %v11, 24
    %v13 = vpop.permute.xlu0 %12
    %vm14 = vcmask 261312
    %15 = vst.msk [vmem:[#allocation0] sm:$0x1] %vm14, %v13
    %s16 = scalar_lea.vmem [#allocation1], 2
    %v17 = vld [vmem:[%s16] sm:$0x1]
    %18 = vrot.lane.b32.xlu0 %v17, 16
    %v19 = vpop.permute.xlu0 %18
    %vm20 = vcmask 195712
    %21 = vst.msk [vmem:[#allocation0] sm:$0x1] %vm20, %v19
    %s22 = scalar_lea.vmem [#allocation1], 1
    %v23 = vld [vmem:[%s22] sm:$0x1]
    %24 = vrot.lane.b32.xlu0 %v23, 8
    %v25 = vpop.permute.xlu0 %24
    %vm26 = vcmask 130112
    %27 = vst.msk [vmem:[#allocation0] sm:$0x1] %vm26, %v25
    %s29 = sshll.u32 1, 1
    %s30 = ssub.s32 %s29, 1
    %v32 = vld [vmem:[#allocation0] sm:%s30]
    %s33 = sshll.u32 1, 1
    %s34 = ssub.s32 %s33, 1
    %35 = vst [vmem:[%s1] sm:%s34] %v32

// kernel: approx_function_forward.1
$region0: #{approx_function_forward.1}
  #allocation0 [shape = 'u32[]', space=smem, size = 0x4, offset = 0x4, fixed_abs, tag = 'smem constant byte address 0x4 - core index']
  #allocation1 [shape = 'u32[144,128]{1,0:T(1,128)}', space=vmem, size = 0x12000, scoped, tag = 'internal scratch']
  %s0 = inlined_call_operand.vmem [shape: f32[16,128], index: 0, kind: input, shape index: {}]
  %s1 = inlined_call_operand.vmem [shape: f32[128,256], index: 1, kind: input, shape index: {}]
  %s2 = inlined_call_operand.vmem [shape: f32[256,128], index: 2, kind: input, shape index: {}]
  %s3 = inlined_call_operand.vmem [shape: f32[128,32], index: 3, kind: input, shape index: {}]
  %s4 = inlined_call_operand.vmem [shape: f32[1,416], index: 4, kind: input, shape index: {}]
  %s5 = inlined_call_operand.vmem [shape: f32[16,32], index: 5, kind: output, shape index: {}]
  %s6 = sld [smem:[#allocation0]]
  $region30: #{approx_function_forward.1} parent=0
    _
  %s8 = ssub.s32 1, %s6
  %s9 = scalar_select 0, %s8, %s6
  // Predicated region
  $region2: #{approx_function_forward.1} parent=0 // pred_check
    _
  $region3: #{approx_function_forward.1} parent=0 // pred_check_branch
    %11 = sbr.rel (0) target = $region5
  $region4: #{approx_function_forward.1} parent=0 // pred_region
    _
  $region5: #{approx_function_forward.1} parent=0 // pred_fallthru
    _
  // Predicated region
  $region6: #{approx_function_forward.1} parent=0 // pred_check
    _
  $region7: #{approx_function_forward.1} parent=0 // pred_check_branch
    %13 = sbr.rel (0) target = $region9
  $region8: #{approx_function_forward.1} parent=0 // pred_region
    _
  $region9: #{approx_function_forward.1} parent=0 // pred_fallthru
    _
  // Predicated region
  $region10: #{approx_function_forward.1} parent=0 // pred_check
    _
  $region11: #{approx_function_forward.1} parent=0 // pred_check_branch
    %15 = sbr.rel (0) target = $region13
  $region12: #{approx_function_forward.1} parent=0 // pred_region
    _
  $region13: #{approx_function_forward.1} parent=0 // pred_fallthru
    _
  // Predicated region
  $region14: #{approx_function_forward.1} parent=0 // pred_check
    _
  $region15: #{approx_function_forward.1} parent=0 // pred_check_branch
    %17 = sbr.rel (0) target = $region17
  $region16: #{approx_function_forward.1} parent=0 // pred_region
    _
  $region17: #{approx_function_forward.1} parent=0 // pred_fallthru
    _
  // Predicated region
  $region18: #{approx_function_forward.1} parent=0 // pred_check
    _
  $region19: #{approx_function_forward.1} parent=0 // pred_check_branch
    %19 = sbr.rel (0) target = $region21
  $region20: #{approx_function_forward.1} parent=0 // pred_region
    _
  $region21: #{approx_function_forward.1} parent=0 // pred_fallthru
    _
  %v20 = vld [vmem:[%s0] sm:$0xff]
  %v21 = vld [vmem:[%s0 + $0x8] sm:$0xff]
  %v22 = vld [vmem:[%s1] sm:$0xff]
  %v23 = vld [vmem:[%s1 + $0x8] sm:$0xff]
  %v24 = vld [vmem:[%s1 + $0x10] sm:$0xff]
  %v25 = vld [vmem:[%s1 + $0x18] sm:$0xff]
  %v26 = vld [vmem:[%s1 + $0x20] sm:$0xff]
  %v27 = vld [vmem:[%s1 + $0x28] sm:$0xff]
  %v28 = vld [vmem:[%s1 + $0x30] sm:$0xff]
  %v29 = vld [vmem:[%s1 + $0x38] sm:$0xff]
  %v30 = vld [vmem:[%s1 + $0x40] sm:$0xff]
  %v31 = vld [vmem:[%s1 + $0x48] sm:$0xff]
  %v32 = vld [vmem:[%s1 + $0x50] sm:$0xff]
  %v33 = vld [vmem:[%s1 + $0x58] sm:$0xff]
  %v34 = vld [vmem:[%s1 + $0x60] sm:$0xff]
  %v35 = vld [vmem:[%s1 + $0x68] sm:$0xff]
  %v36 = vld [vmem:[%s1 + $0x70] sm:$0xff]
  %v37 = vld [vmem:[%s1 + $0x78] sm:$0xff]
  %v38 = vld [vmem:[%s1 + $0x80] sm:$0xff]
  %v39 = vld [vmem:[%s1 + $0x88] sm:$0xff]
  %v40 = vld [vmem:[%s1 + $0x90] sm:$0xff]
  %v41 = vld [vmem:[%s1 + $0x98] sm:$0xff]
  %v42 = vld [vmem:[%s1 + $0xa0] sm:$0xff]
  %v43 = vld [vmem:[%s1 + $0xa8] sm:$0xff]
  %v44 = vld [vmem:[%s1 + $0xb0] sm:$0xff]
  %v45 = vld [vmem:[%s1 + $0xb8] sm:$0xff]
  %v46 = vld [vmem:[%s1 + $0xc0] sm:$0xff]
  %v47 = vld [vmem:[%s1 + $0xc8] sm:$0xff]
  %v48 = vld [vmem:[%s1 + $0xd0] sm:$0xff]
  %v49 = vld [vmem:[%s1 + $0xd8] sm:$0xff]
  %v50 = vld [vmem:[%s1 + $0xe0] sm:$0xff]
  %v51 = vld [vmem:[%s1 + $0xe8] sm:$0xff]
  %v52 = vld [vmem:[%s1 + $0xf0] sm:$0xff]
  %v53 = vld [vmem:[%s1 + $0xf8] sm:$0xff]
  %v54 = vld [vmem:[%s4] sm:$0x3]
  %v56 = vlaneseq
  %v57 = vshrl.u32 %v56, 7
  %v58 = vsub.s32 0, %v57
  %v59 = vrot.slane %v54, %v58
  %v60 = vlaneseq
  %v61 = vshrl.u32 %v60, 7
  %v62 = vsub.s32 1, %v61
  %v63 = vrot.slane %v54, %v62
  %66 = vmatprep.subr.mxu0 %v53
  %67 = vmatpush1.msra.mxu0 %v52
  %68 = vmatprep.subr.mxu0 %v51
  %69 = vmatpush1.msra.mxu0 %v50
  %70 = vmatprep.subr.mxu0 %v49
  %71 = vmatpush1.msra.mxu0 %v48
  %72 = vmatprep.subr.mxu0 %v47
  %73 = vmatpush1.msra.mxu0 %v46
  %74 = vmatprep.subr.mxu0 %v45
  %75 = vmatpush1.msra.mxu0 %v44
  %76 = vmatprep.subr.mxu0 %v43
  %77 = vmatpush1.msra.mxu0 %v42
  %78 = vmatprep.subr.mxu0 %v41
  %79 = vmatpush1.msra.mxu0 %v40
  %80 = vmatprep.subr.mxu0 %v39
  %81 = vmatpush1.msra.mxu0 %v38
  %82 = vmatprep.subr.mxu0 %v37
  %83 = vmatpush1.msra.mxu0 %v36
  %84 = vmatprep.subr.mxu0 %v35
  %85 = vmatpush1.msra.mxu0 %v34
  %86 = vmatprep.subr.mxu0 %v33
  %87 = vmatpush1.msra.mxu0 %v32
  %88 = vmatprep.subr.mxu0 %v31
  %89 = vmatpush1.msra.mxu0 %v30
  %90 = vmatprep.subr.mxu0 %v29
  %91 = vmatpush1.msra.mxu0 %v28
  %92 = vmatprep.subr.mxu0 %v27
  %93 = vmatpush1.msra.mxu0 %v26
  %94 = vmatprep.subr.mxu0 %v25
  %95 = vmatpush1.msra.mxu0 %v24
  %96 = vmatprep.subr.mxu0 %v23
  %97 = vmatpush1.msra.mxu0 %v22
  %98 = vmatprep.subr.mxu0 0.0
  %99 = vmatpush2.msra.mxu0 0.0
  %100 = vmatprep.subr.mxu0 0.0
  %101 = vmatpush2.msra.mxu0 0.0
  %102 = vmatprep.subr.mxu0 0.0
  %103 = vmatpush2.msra.mxu0 0.0
  %104 = vmatprep.subr.mxu0 0.0
  %105 = vmatpush2.msra.mxu0 0.0
  %106 = vmatprep.subr.mxu0 0.0
  %107 = vmatpush2.msra.mxu0 0.0
  %108 = vmatprep.subr.mxu0 0.0
  %109 = vmatpush2.msra.mxu0 0.0
  %110 = vmatprep.subr.mxu0 0.0
  %111 = vmatpush2.msra.mxu0 0.0
  %112 = vmatprep.subr.mxu0 0.0
  %113 = vmatpush2.msra.mxu0 0.0
  %114 = vmatprep.subr.mxu0 0.0
  %115 = vmatpush2.msra.mxu0 0.0
  %116 = vmatprep.subr.mxu0 0.0
  %117 = vmatpush2.msra.mxu0 0.0
  %118 = vmatprep.subr.mxu0 0.0
  %119 = vmatpush2.msra.mxu0 0.0
  %120 = vmatprep.subr.mxu0 0.0
  %121 = vmatpush2.msra.mxu0 0.0
  %122 = vmatprep.subr.mxu0 0.0
  %123 = vmatpush2.msra.mxu0 0.0
  %124 = vmatprep.subr.mxu0 0.0
  %125 = vmatpush2.msra.mxu0 0.0
  %126 = vmatprep.subr.mxu0 0.0
  %127 = vmatpush2.msra.mxu0 0.0
  %128 = vmatprep.subr.mxu0 0.0
  %129 = vmatpush2.msra.mxu0 0.0
  %130 = vmatprep.mubr.f32.mxu0 0.0
  %131 = vmatmul.mubr.f32.gmra.mxu0 %v20
  %v132 = vpop.f32.mrf.mxu0
  %v133 = vadd.f32 %v59, %v132
  %v134 = vpop.f32.mrf.mxu0
  %v135 = vadd.f32 %v63, %v134
  %136 = vmatprep.mubr.f32.mxu0 0.0
  %137 = vmatmul.mubr.f32.gmra.mxu0 %v21
  %v138 = vpop.f32.mrf.mxu0
  %v139 = vadd.f32 %v59, %v138
  %v140 = vpop.f32.mrf.mxu0
  %v141 = vadd.f32 %v63, %v140
  %142 = vdwg.mxu0
  %v143 = vmax.f32 %v133, 0.0
  %v144 = vmax.f32 %v135, 0.0
  %v145 = vmax.f32 %v139, 0.0
  %v146 = vmax.f32 %v141, 0.0
  %v147 = vld [vmem:[%s2] sm:$0xff]
  %v148 = vld [vmem:[%s2 + $0x8] sm:$0xff]
  %v149 = vld [vmem:[%s2 + $0x10] sm:$0xff]
  %v150 = vld [vmem:[%s2 + $0x18] sm:$0xff]
  %v151 = vld [vmem:[%s2 + $0x20] sm:$0xff]
  %v152 = vld [vmem:[%s2 + $0x28] sm:$0xff]
  %v153 = vld [vmem:[%s2 + $0x30] sm:$0xff]
  %v154 = vld [vmem:[%s2 + $0x38] sm:$0xff]
  %v155 = vld [vmem:[%s2 + $0x40] sm:$0xff]
  %v156 = vld [vmem:[%s2 + $0x48] sm:$0xff]
  %v157 = vld [vmem:[%s2 + $0x50] sm:$0xff]
  %v158 = vld [vmem:[%s2 + $0x58] sm:$0xff]
  %v159 = vld [vmem:[%s2 + $0x60] sm:$0xff]
  %v160 = vld [vmem:[%s2 + $0x68] sm:$0xff]
  %v161 = vld [vmem:[%s2 + $0x70] sm:$0xff]
  %v162 = vld [vmem:[%s2 + $0x78] sm:$0xff]
  %v163 = vld [vmem:[%s2 + $0x80] sm:$0xff]
  %v164 = vld [vmem:[%s2 + $0x88] sm:$0xff]
  %v165 = vld [vmem:[%s2 + $0x90] sm:$0xff]
  %v166 = vld [vmem:[%s2 + $0x98] sm:$0xff]
  %v167 = vld [vmem:[%s2 + $0xa0] sm:$0xff]
  %v168 = vld [vmem:[%s2 + $0xa8] sm:$0xff]
  %v169 = vld [vmem:[%s2 + $0xb0] sm:$0xff]
  %v170 = vld [vmem:[%s2 + $0xb8] sm:$0xff]
  %v171 = vld [vmem:[%s2 + $0xc0] sm:$0xff]
  %v172 = vld [vmem:[%s2 + $0xc8] sm:$0xff]
  %v173 = vld [vmem:[%s2 + $0xd0] sm:$0xff]
  %v174 = vld [vmem:[%s2 + $0xd8] sm:$0xff]
  %v175 = vld [vmem:[%s2 + $0xe0] sm:$0xff]
  %v176 = vld [vmem:[%s2 + $0xe8] sm:$0xff]
  %v177 = vld [vmem:[%s2 + $0xf0] sm:$0xff]
  %v178 = vld [vmem:[%s2 + $0xf8] sm:$0xff]
  %v179 = vld [vmem:[%s4 + $0x2] sm:$0x1]
  %v181 = vlaneseq
  %v182 = vshrl.u32 %v181, 7
  %v183 = vsub.s32 0, %v182
  %v184 = vrot.slane %v179, %v183
  %186 = vmatprep.subr.mxu0 0.0
  %187 = vmatpush1.msra.mxu0 %v162
  %188 = vmatprep.subr.mxu0 0.0
  %189 = vmatpush1.msra.mxu0 %v161
  %190 = vmatprep.subr.mxu0 0.0
  %191 = vmatpush1.msra.mxu0 %v160
  %192 = vmatprep.subr.mxu0 0.0
  %193 = vmatpush1.msra.mxu0 %v159
  %194 = vmatprep.subr.mxu0 0.0
  %195 = vmatpush1.msra.mxu0 %v158
  %196 = vmatprep.subr.mxu0 0.0
  %197 = vmatpush1.msra.mxu0 %v157
  %198 = vmatprep.subr.mxu0 0.0
  %199 = vmatpush1.msra.mxu0 %v156
  %200 = vmatprep.subr.mxu0 0.0
  %201 = vmatpush1.msra.mxu0 %v155
  %202 = vmatprep.subr.mxu0 0.0
  %203 = vmatpush1.msra.mxu0 %v154
  %204 = vmatprep.subr.mxu0 0.0
  %205 = vmatpush1.msra.mxu0 %v153
  %206 = vmatprep.subr.mxu0 0.0
  %207 = vmatpush1.msra.mxu0 %v152
  %208 = vmatprep.subr.mxu0 0.0
  %209 = vmatpush1.msra.mxu0 %v151
  %210 = vmatprep.subr.mxu0 0.0
  %211 = vmatpush1.msra.mxu0 %v150
  %212 = vmatprep.subr.mxu0 0.0
  %213 = vmatpush1.msra.mxu0 %v149
  %214 = vmatprep.subr.mxu0 0.0
  %215 = vmatpush1.msra.mxu0 %v148
  %216 = vmatprep.subr.mxu0 0.0
  %217 = vmatpush1.msra.mxu0 %v147
  %218 = vmatprep.subr.mxu0 0.0
  %219 = vmatpush2.msra.mxu0 %v178
  %220 = vmatprep.subr.mxu0 0.0
  %221 = vmatpush2.msra.mxu0 %v177
  %222 = vmatprep.subr.mxu0 0.0
  %223 = vmatpush2.msra.mxu0 %v176
  %224 = vmatprep.subr.mxu0 0.0
  %225 = vmatpush2.msra.mxu0 %v175
  %226 = vmatprep.subr.mxu0 0.0
  %227 = vmatpush2.msra.mxu0 %v174
  %228 = vmatprep.subr.mxu0 0.0
  %229 = vmatpush2.msra.mxu0 %v173
  %230 = vmatprep.subr.mxu0 0.0
  %231 = vmatpush2.msra.mxu0 %v172
  %232 = vmatprep.subr.mxu0 0.0
  %233 = vmatpush2.msra.mxu0 %v171
  %234 = vmatprep.subr.mxu0 0.0
  %235 = vmatpush2.msra.mxu0 %v170
  %236 = vmatprep.subr.mxu0 0.0
  %237 = vmatpush2.msra.mxu0 %v169
  %238 = vmatprep.subr.mxu0 0.0
  %239 = vmatpush2.msra.mxu0 %v168
  %240 = vmatprep.subr.mxu0 0.0
  %241 = vmatpush2.msra.mxu0 %v167
  %242 = vmatprep.subr.mxu0 0.0
  %243 = vmatpush2.msra.mxu0 %v166
  %244 = vmatprep.subr.mxu0 0.0
  %245 = vmatpush2.msra.mxu0 %v165
  %246 = vmatprep.subr.mxu0 0.0
  %247 = vmatpush2.msra.mxu0 %v164
  %248 = vmatprep.subr.mxu0 0.0
  %249 = vmatpush2.msra.mxu0 %v163
  %250 = vmatprep.mubr.f32.mxu0 %v144
  %251 = vmatmul.mubr.f32.gmra.mxu0 %v143
  %v252 = vpop.f32.mrf.mxu0
  %v253 = vadd.f32 %v184, %v252
  %v254 = vpop.f32.mrf.mxu0
  %255 = vmatprep.mubr.f32.mxu0 %v146
  %256 = vmatmul.mubr.f32.gmra.mxu0 %v145
  %v257 = vpop.f32.mrf.mxu0
  %v258 = vadd.f32 %v184, %v257
  %v259 = vpop.f32.mrf.mxu0
  %260 = vdwg.mxu0
  %v261 = vmax.f32 %v253, 0.0
  %v262 = vmax.f32 %v258, 0.0
  %v263 = vld [vmem:[%s3] sm:$0xff]
  %v264 = vld [vmem:[%s3 + $0x8] sm:$0xff]
  %v265 = vld [vmem:[%s3 + $0x10] sm:$0xff]
  %v266 = vld [vmem:[%s3 + $0x18] sm:$0xff]
  %v267 = vld [vmem:[%s3 + $0x20] sm:$0xff]
  %v268 = vld [vmem:[%s3 + $0x28] sm:$0xff]
  %v269 = vld [vmem:[%s3 + $0x30] sm:$0xff]
  %v270 = vld [vmem:[%s3 + $0x38] sm:$0xff]
  %v271 = vld [vmem:[%s3 + $0x40] sm:$0xff]
  %v272 = vld [vmem:[%s3 + $0x48] sm:$0xff]
  %v273 = vld [vmem:[%s3 + $0x50] sm:$0xff]
  %v274 = vld [vmem:[%s3 + $0x58] sm:$0xff]
  %v275 = vld [vmem:[%s3 + $0x60] sm:$0xff]
  %v276 = vld [vmem:[%s3 + $0x68] sm:$0xff]
  %v277 = vld [vmem:[%s3 + $0x70] sm:$0xff]
  %v278 = vld [vmem:[%s3 + $0x78] sm:$0xff]
  %v279 = vld [vmem:[%s4 + $0x3] sm:$0x1]
  %v281 = vlaneseq
  %v282 = vshrl.u32 %v281, 7
  %v283 = vsub.s32 0, %v282
  %v284 = vrot.slane %v279, %v283
  %286 = vmatprep.subr.mxu0 0.0
  %287 = vmatpush1.msra.mxu0 %v278
  %288 = vmatprep.subr.mxu0 0.0
  %289 = vmatpush1.msra.mxu0 %v277
  %290 = vmatprep.subr.mxu0 0.0
  %291 = vmatpush1.msra.mxu0 %v276
  %292 = vmatprep.subr.mxu0 0.0
  %293 = vmatpush1.msra.mxu0 %v275
  %294 = vmatprep.subr.mxu0 0.0
  %295 = vmatpush1.msra.mxu0 %v274
  %296 = vmatprep.subr.mxu0 0.0
  %297 = vmatpush1.msra.mxu0 %v273
  %298 = vmatprep.subr.mxu0 0.0
  %299 = vmatpush1.msra.mxu0 %v272
  %300 = vmatprep.subr.mxu0 0.0
  %301 = vmatpush1.msra.mxu0 %v271
  %302 = vmatprep.subr.mxu0 0.0
  %303 = vmatpush1.msra.mxu0 %v270
  %304 = vmatprep.subr.mxu0 0.0
  %305 = vmatpush1.msra.mxu0 %v269
  %306 = vmatprep.subr.mxu0 0.0
  %307 = vmatpush1.msra.mxu0 %v268
  %308 = vmatprep.subr.mxu0 0.0
  %309 = vmatpush1.msra.mxu0 %v267
  %310 = vmatprep.subr.mxu0 0.0
  %311 = vmatpush1.msra.mxu0 %v266
  %312 = vmatprep.subr.mxu0 0.0
  %313 = vmatpush1.msra.mxu0 %v265
  %314 = vmatprep.subr.mxu0 0.0
  %315 = vmatpush1.msra.mxu0 %v264
  %316 = vmatprep.subr.mxu0 0.0
  %317 = vmatpush1.msra.mxu0 %v263
  %318 = vmatprep.subr.mxu0 0.0
  %319 = vmatpush2.msra.mxu0 0.0
  %320 = vmatprep.subr.mxu0 0.0
  %321 = vmatpush2.msra.mxu0 0.0
  %322 = vmatprep.subr.mxu0 0.0
  %323 = vmatpush2.msra.mxu0 0.0
  %324 = vmatprep.subr.mxu0 0.0
  %325 = vmatpush2.msra.mxu0 0.0
  %326 = vmatprep.subr.mxu0 0.0
  %327 = vmatpush2.msra.mxu0 0.0
  %328 = vmatprep.subr.mxu0 0.0
  %329 = vmatpush2.msra.mxu0 0.0
  %330 = vmatprep.subr.mxu0 0.0
  %331 = vmatpush2.msra.mxu0 0.0
  %332 = vmatprep.subr.mxu0 0.0
  %333 = vmatpush2.msra.mxu0 0.0
  %334 = vmatprep.subr.mxu0 0.0
  %335 = vmatpush2.msra.mxu0 0.0
  %336 = vmatprep.subr.mxu0 0.0
  %337 = vmatpush2.msra.mxu0 0.0
  %338 = vmatprep.subr.mxu0 0.0
  %339 = vmatpush2.msra.mxu0 0.0
  %340 = vmatprep.subr.mxu0 0.0
  %341 = vmatpush2.msra.mxu0 0.0
  %342 = vmatprep.subr.mxu0 0.0
  %343 = vmatpush2.msra.mxu0 0.0
  %344 = vmatprep.subr.mxu0 0.0
  %345 = vmatpush2.msra.mxu0 0.0
  %346 = vmatprep.subr.mxu0 0.0
  %347 = vmatpush2.msra.mxu0 0.0
  %348 = vmatprep.subr.mxu0 0.0
  %349 = vmatpush2.msra.mxu0 0.0
  %350 = vmatprep.mubr.f32.mxu0 0.0
  %351 = vmatmul.mubr.f32.gmra.mxu0 %v261
  %v352 = vpop.f32.mrf.mxu0
  %v353 = vadd.f32 %v284, %v352
  %v354 = vpop.f32.mrf.mxu0
  %355 = vmatprep.mubr.f32.mxu0 0.0
  %356 = vmatmul.mubr.f32.gmra.mxu0 %v262
  %v357 = vpop.f32.mrf.mxu0
  %v358 = vadd.f32 %v284, %v357
  %v359 = vpop.f32.mrf.mxu0
  %360 = vdwg.mxu0
  %vm361 = vcmask 261120
  %362 = vst.msk [vmem:[%s5] sm:$0xff] %vm361, %v353
  %363 = vst.msk [vmem:[%s5 + $0x8] sm:$0xff] %vm361, %v358
  // Predicated region
  $region22: #{approx_function_forward.1} parent=0 // pred_check
    _
  $region23: #{approx_function_forward.1} parent=0 // pred_check_branch
    %365 = sbr.rel (0) target = $region25
  $region24: #{approx_function_forward.1} parent=0 // pred_region
    _
  $region25: #{approx_function_forward.1} parent=0 // pred_fallthru
    _
  // Predicated region
  $region26: #{approx_function_forward.1} parent=0 // pred_check
    _
  $region27: #{approx_function_forward.1} parent=0 // pred_check_branch
    %367 = sbr.rel (0) target = $region29
  $region28: #{approx_function_forward.1} parent=0 // pred_region
    _
  $region29: #{approx_function_forward.1} parent=0 // pred_fallthru
    _

</llo_original>
